<compile_context>
chip_gen: v7x
topology: tpu7x:2x2x1
jax: 0.10.0
libtpu: 0.0.40
codegen_flags: <defaults>
</compile_context>

<pallas_src>
import functools

import jax
import jax.numpy as jnp
from jax.experimental import pallas as pl
from jax.experimental.pallas import tpu as pltpu

_LANE = 128
_SUBLANE = 8
_DEFAULT_VMEM_LIMIT = 48 * 1024 * 1024   # safe on every generation (v7x physical = 64 MiB)


def _round_up(n, m):
    return ((n + m - 1) // m) * m


@functools.lru_cache(maxsize=None)
def _vmem_limit_bytes():
    """Generation-aware scoped-VMEM budget: ~75% of physical VMEM, >= 48 MiB."""
    try:
        cap = int(pltpu.get_tpu_info().vmem_capacity_bytes)
    except Exception:
        return _DEFAULT_VMEM_LIMIT
    return max(_DEFAULT_VMEM_LIMIT, (cap * 3) // 4)


# -----------------------------------------------------------------------------
# One-time parameter preparation (hoisted out of the hot path).
# -----------------------------------------------------------------------------
def prepare_lstm_step_params(params, *, th=None, param_dtype=jnp.bfloat16):
    """Fuses/transposes/pads the LSTMCell weights for the single-step kernel.

    Returned weight has shape (n_tiles, I+H, 4*th); in tile j, columns
    [g*th:(g+1)*th] hold the transposed weights of gate g (torch.chunk order
    i, f, g, o) for hidden units [j*th, (j+1)*th).  Biases are pre-summed, f32.
    Weights are stored in `param_dtype` (bf16 default, f32 accumulation in-kernel).
    """
    w_ih, w_hh, b_ih, b_hh = params
    w_ih = jnp.asarray(w_ih, jnp.float32)
    w_hh = jnp.asarray(w_hh, jnp.float32)
    H = w_hh.shape[1]
    I = w_ih.shape[1]
    K = I + H
    Hp = _round_up(H, _LANE)

    if th is None:
        # Pick the largest tile whose double-buffered weight block fits ~half the
        # scoped VMEM budget; prefer >= 2 tiles so the "parallel" hidden axis can
        # shard across v7x's two TensorCores.
        vmem = _vmem_limit_bytes()
        itemsize = jnp.dtype(param_dtype).itemsize
        budget = vmem // 2
        cands = [t for t in (1024, 512, 256, 128) if Hp % t == 0]
        th = next((t for t in cands if 2 * K * 4 * t * itemsize <= budget), 128)
        if Hp // th < 2 and Hp >= 2 * _LANE:
            th = max(_LANE, th // 2)
    assert Hp % th == 0 and th % _LANE == 0
    n_tiles = Hp // th

    w_cat = jnp.concatenate([w_ih, w_hh], axis=1)                 # (4H, K)
    w4 = w_cat.reshape(4, H, K)
    w4 = jnp.pad(w4, ((0, 0), (0, Hp - H), (0, 0)))               # (4, Hp, K)
    w4 = w4.reshape(4, n_tiles, th, K)
    w = jnp.transpose(w4, (1, 3, 0, 2)).reshape(n_tiles, K, 4 * th).astype(param_dtype)

    b = (jnp.asarray(b_ih, jnp.float32) + jnp.asarray(b_hh, jnp.float32)).reshape(4, H)
    b = jnp.pad(b, ((0, 0), (0, Hp - H))).reshape(4, n_tiles, th)
    b = jnp.transpose(b, (1, 0, 2)).reshape(n_tiles, 1, 4 * th)   # stays f32

    return dict(w=w, b=b, I=I, H=H, Hp=Hp, K=K, th=th, n_tiles=n_tiles)


def prepare_lstm_seq_params(params, *, param_dtype=jnp.bfloat16):
    """Builds the fused, transposed, padded weights for the in-kernel-time-loop kernel.

    W_cat has shape (Ip + Hp, 4*Hp): rows [0, Ip) are the (lane-padded) input weights,
    rows [Ip, Ip+Hp) the hidden weights; column g*Hp + h is gate g, hidden unit h.
    """
    w_ih, w_hh, b_ih, b_hh = params
    w_ih = jnp.asarray(w_ih, jnp.float32)
    w_hh = jnp.asarray(w_hh, jnp.float32)
    H = w_hh.shape[1]
    I = w_ih.shape[1]
    Hp = _round_up(H, _LANE)
    Ip = _round_up(I, _LANE)
    Kp = Ip + Hp

    wih4 = jnp.pad(w_ih.reshape(4, H, I), ((0, 0), (0, Hp - H), (0, Ip - I)))   # (4, Hp, Ip)
    whh4 = jnp.pad(w_hh.reshape(4, H, H), ((0, 0), (0, Hp - H), (0, Hp - H)))   # (4, Hp, Hp)
    wih_t = jnp.transpose(wih4, (2, 0, 1)).reshape(Ip, 4 * Hp)
    whh_t = jnp.transpose(whh4, (2, 0, 1)).reshape(Hp, 4 * Hp)
    w_cat = jnp.concatenate([wih_t, whh_t], axis=0).astype(param_dtype)         # (Kp, 4*Hp)

    b = (jnp.asarray(b_ih, jnp.float32) + jnp.asarray(b_hh, jnp.float32)).reshape(4, H)
    bias = jnp.pad(b, ((0, 0), (0, Hp - H))).reshape(1, 4 * Hp)                 # stays f32

    return dict(w_cat=w_cat, bias=bias, I=I, Ip=Ip, H=H, Hp=Hp, Kp=Kp)


# -----------------------------------------------------------------------------
# Kernels
# -----------------------------------------------------------------------------
def _lstm_step_kernel(xh_ref, cx_ref, w_ref, b_ref, hy_ref, cy_ref):
    # One hidden tile: gates = [x|hx] @ W_tile + (b_ih + b_hh)_tile   -> (Bp, 4*th), f32
    w = w_ref[...]                                                  # (K, 4*th)
    gates = jnp.dot(xh_ref[...].astype(w.dtype), w,
                    preferred_element_type=jnp.float32) + b_ref[...]
    th = hy_ref.shape[-1]
    i = jax.nn.sigmoid(gates[:, 0 * th:1 * th])
    f = jax.nn.sigmoid(gates[:, 1 * th:2 * th])
    g = jnp.tanh(gates[:, 2 * th:3 * th])
    o = jax.nn.sigmoid(gates[:, 3 * th:4 * th])
    cy = f * cx_ref[...].astype(jnp.float32) + i * g
    hy = o * jnp.tanh(cy)
    cy_ref[...] = cy.astype(cy_ref.dtype)
    hy_ref[...] = hy.astype(hy_ref.dtype)


def _make_seq_kernel(tt, t_total, ip, hp):
    """Sequence kernel: one grid step == `tt` timesteps (unrolled fori_loop).

    h/c are carried in f32 VMEM scratch; x_t and h_prev are packed into a single
    (Bp, Ip+Hp) scratch in the weight dtype so each step is ONE fused MXU dot.
    """
    exact = (t_total % tt) == 0

    def kernel(x_ref, h0_ref, c0_ref, w_ref, b_ref, hseq_ref, cfin_ref,
               h_sc, c_sc, xh_sc):
        chunk = pl.program_id(0)

        @pl.when(chunk == 0)
        def _():
            h_sc[...] = h0_ref[...].astype(jnp.float32)
            c_sc[...] = c0_ref[...].astype(jnp.float32)

        wd = w_ref.dtype

        def one_step(s):
            xh_sc[:, :ip] = x_ref[s].astype(wd)       # lane-aligned (Ip is a 128-multiple)
            xh_sc[:, ip:] = h_sc[...].astype(wd)
            # TODO(synk): for Hp >= 1024, tile the 4*Hp gate columns here (fori_loop over
            # column blocks) to bound the f32 `gates` live set under 64 vregs.
            gates = (jnp.dot(xh_sc[...], w_ref[...],
                             preferred_element_type=jnp.float32) + b_ref[...])
            i = jax.nn.sigmoid(gates[:, 0 * hp:1 * hp])
            f = jax.nn.sigmoid(gates[:, 1 * hp:2 * hp])
            g = jnp.tanh(gates[:, 2 * hp:3 * hp])
            o = jax.nn.sigmoid(gates[:, 3 * hp:4 * hp])
            cy = f * c_sc[...] + i * g
            hy = o * jnp.tanh(cy)
            c_sc[...] = cy
            h_sc[...] = hy
            hseq_ref[s] = hy.astype(hseq_ref.dtype)

        def body(s, carry):
            if exact:
                one_step(s)
            else:
                @pl.when(chunk * tt + s < t_total)    # tail chunk: skip padded timesteps
                def _():
                    one_step(s)
            return carry

        jax.lax.fori_loop(0, tt, body, 0, unroll=True)

        @pl.when(chunk == pl.num_programs(0) - 1)     # only the last chunk owns c_final
        def _():
            cfin_ref[...] = c_sc[...].astype(cfin_ref.dtype)

    return kernel


# -----------------------------------------------------------------------------
# Wrappers
# -----------------------------------------------------------------------------
def lstm_cell_forward(x, state, prep):
    """Single LSTMCell step (same semantics as the PyTorch module). Returns (hy, cy)."""
    B, I = x.shape
    assert I == prep["I"]
    H, Hp, K, th, n_tiles = prep["H"], prep["Hp"], prep["K"], prep["th"], prep["n_tiles"]

    if state is None:  # module's _init_hidden path
        hx = jnp.zeros((B, H), x.dtype)
        cx = jnp.zeros((B, H), x.dtype)
    else:
        hx, cx = state
        hx = hx.astype(x.dtype)
        cx = cx.astype(x.dtype)

    Bp = _round_up(B, _SUBLANE)
    # TODO(synk): the wrapper-side concat/pad still round-trips (Bp,K)/(Bp,Hp) through HBM;
    # latency-minor vs the weight DMA, an in-kernel scratch concat would remove it.
    xh = jnp.pad(jnp.concatenate([x, hx], axis=1), ((0, Bp - B), (0, 0)))   # (Bp, K)
    cx_p = jnp.pad(cx, ((0, Bp - B), (0, Hp - H)))                          # (Bp, Hp)

    hy, cy = pl.pallas_call(
        _lstm_step_kernel,
        out_shape=(
            jax.ShapeDtypeStruct((Bp, Hp), x.dtype),
            jax.ShapeDtypeStruct((Bp, Hp), x.dtype),
        ),
        grid_spec=pltpu.PrefetchScalarGridSpec(
            num_scalar_prefetch=0,
            grid=(n_tiles,),
            in_specs=[
                pl.BlockSpec((Bp, K), lambda j: (0, 0),
                             pipeline_mode=pl.Buffered(1)),              # xh: resident
                pl.BlockSpec((Bp, th), lambda j: (0, j)),                # cx tile
                pl.BlockSpec((None, K, 4 * th), lambda j: (j, 0, 0)),    # weight tile
                pl.BlockSpec((None, 1, 4 * th), lambda j: (j, 0, 0)),    # bias tile
            ],
            out_specs=[
                pl.BlockSpec((Bp, th), lambda j: (0, j)),
                pl.BlockSpec((Bp, th), lambda j: (0, j)),
            ],
        ),
        compiler_params=pltpu.CompilerParams(
            dimension_semantics=("parallel",),
            vmem_limit_bytes=_vmem_limit_bytes(),
        ),
        input_output_aliases={1: 1},   # padded cx temp reuses the cy output HBM buffer
    )(xh, cx_p, prep["w"], prep["b"])
    return hy[:B, :H], cy[:B, :H]


def lstm_sequence_forward(x_seq, state, prep, *, tt=16):
    """Run the cell over a (T, B, I) sequence with the time loop inside the kernel.

    Weights stay resident (single-buffered) in VMEM across all T steps; h/c are carried
    in f32 scratch; `tt` timesteps are processed per grid step.
    Returns (h_seq of shape (T, B, H), final c of shape (B, H)).
    """
    # TODO(synk): v7x dual-TensorCore split of the 4*Hp gate columns (core_map + VMEM_SHARED
    # hy exchange) is not implemented; for Hp >= ~1024 on v7x that would ~2x per-step MXU/vld.
    T, B, I = x_seq.shape
    assert I == prep["I"]
    H, Hp, Ip, Kp = prep["H"], prep["Hp"], prep["Ip"], prep["Kp"]
    wd = prep["w_cat"].dtype

    if state is None:
        hx = jnp.zeros((B, H), x_seq.dtype)
        cx = jnp.zeros((B, H), x_seq.dtype)
    else:
        hx, cx = state
        hx = hx.astype(x_seq.dtype)
        cx = cx.astype(x_seq.dtype)

    # Batch padding respects the packed-dtype sublane tile of the xh scratch (16 for bf16).
    sub = _SUBLANE * 4 // jnp.dtype(wd).itemsize
    Bp = _round_up(B, sub)

    tt = max(1, min(tt, T))
    n_chunks = pl.cdiv(T, tt)
    T_pad = n_chunks * tt

    x_p = jnp.pad(x_seq, ((0, T_pad - T), (0, Bp - B), (0, Ip - I)))
    h0 = jnp.pad(hx, ((0, Bp - B), (0, Hp - H)))
    c0 = jnp.pad(cx, ((0, Bp - B), (0, Hp - H)))

    kernel = _make_seq_kernel(tt, T, Ip, Hp)

    h_seq, c_fin = pl.pallas_call(
        kernel,
        out_shape=(
            jax.ShapeDtypeStruct((T_pad, Bp, Hp), x_seq.dtype),
            jax.ShapeDtypeStruct((Bp, Hp), x_seq.dtype),
        ),
        grid_spec=pltpu.PrefetchScalarGridSpec(
            num_scalar_prefetch=0,
            grid=(n_chunks,),
            in_specs=[
                pl.BlockSpec((tt, Bp, Ip), lambda c: (c, 0, 0)),          # x chunk streams
                pl.BlockSpec((Bp, Hp), lambda c: (0, 0),
                             pipeline_mode=pl.Buffered(1)),               # h0 (read at c==0)
                pl.BlockSpec((Bp, Hp), lambda c: (0, 0),
                             pipeline_mode=pl.Buffered(1)),               # c0 (read at c==0)
                pl.BlockSpec((Kp, 4 * Hp), lambda c: (0, 0),
                             pipeline_mode=pl.Buffered(1)),               # W_cat: resident
                pl.BlockSpec((1, 4 * Hp), lambda c: (0, 0),
                             pipeline_mode=pl.Buffered(1)),               # bias:  resident
            ],
            out_specs=[
                pl.BlockSpec((tt, Bp, Hp), lambda c: (c, 0, 0)),          # h chunk per step
                pl.BlockSpec((Bp, Hp), lambda c: (0, 0)),                 # final c
            ],
            scratch_shapes=[
                pltpu.VMEM((Bp, Hp), jnp.float32),   # h carry
                pltpu.VMEM((Bp, Hp), jnp.float32),   # c carry
                pltpu.VMEM((Bp, Kp), wd),            # packed [x_t | h_prev] MXU operand
            ],
        ),
        compiler_params=pltpu.CompilerParams(
            dimension_semantics=("arbitrary",),      # recurrence over time
            vmem_limit_bytes=_vmem_limit_bytes(),
        ),
    )(x_p, h0, c0, prep["w_cat"], prep["bias"])
    return h_seq[:T, :B, :H], c_fin[:B, :H]


# -----------------------------------------------------------------------------
# Plain-JAX reference (mirrors the PyTorch module exactly)
# -----------------------------------------------------------------------------
def lstm_cell_reference(x, state, params):
    w_ih, w_hh, b_ih, b_hh = params
    hx, cx = state
    gates = x @ w_ih.T + b_ih + hx @ w_hh.T + b_hh
    H = w_hh.shape[1]
    i, f, g, o = (gates[:, k * H:(k + 1) * H] for k in range(4))
    i = jax.nn.sigmoid(i)
    f = jax.nn.sigmoid(f)
    g = jnp.tanh(g)
    o = jax.nn.sigmoid(o)
    cy = f * cx + i * g
    hy = o * jnp.tanh(cy)
    return hy, cy


if __name__ == "__main__":
    B, I, H, T = 8, 16, 32, 10

    key = jax.random.PRNGKey(0)
    ks = jax.random.split(key, 10)
    w_ih = jax.random.normal(ks[0], (4 * H, I), jnp.float32)
    w_hh = jax.random.normal(ks[1], (4 * H, H), jnp.float32)
    b_ih = jax.random.normal(ks[2], (4 * H,), jnp.float32)
    b_hh = jax.random.normal(ks[3], (4 * H,), jnp.float32)
    params = (w_ih, w_hh, b_ih, b_hh)

    x = jax.random.normal(ks[4], (B, I), jnp.float32)
    hx = jax.random.normal(ks[5], (B, H), jnp.float32)
    cx = jax.random.normal(ks[6], (B, H), jnp.float32)
    x_seq = jax.random.normal(ks[7], (T, B, I), jnp.float32)

    # f32-stored weights for exact checks, bf16-stored for the recommended fast path.
    step_prep_f32 = prepare_lstm_step_params(params, param_dtype=jnp.float32)
    seq_prep_f32 = prepare_lstm_seq_params(params, param_dtype=jnp.float32)
    step_prep_bf16 = prepare_lstm_step_params(params)        # default bf16 weights
    seq_prep_bf16 = prepare_lstm_seq_params(params)          # default bf16 weights

    # 1) single step, state=None (module zero-initializes h/c)
    hy0, cy0 = lstm_cell_forward(x, None, step_prep_f32)
    jax.block_until_ready((hy0, cy0))
    zeros = jnp.zeros((B, H), jnp.float32)
    hy0_r, cy0_r = lstm_cell_reference(x, (zeros, zeros), params)
    assert jnp.allclose(hy0, hy0_r, atol=1e-4, rtol=1e-4)
    assert jnp.allclose(cy0, cy0_r, atol=1e-4, rtol=1e-4)

    # 2) single step, provided state
    hy1, cy1 = lstm_cell_forward(x, (hx, cx), step_prep_f32)
    jax.block_until_ready((hy1, cy1))
    hy1_r, cy1_r = lstm_cell_reference(x, (hx, cx), params)
    assert jnp.allclose(hy1, hy1_r, atol=1e-4, rtol=1e-4)
    assert jnp.allclose(cy1, cy1_r, atol=1e-4, rtol=1e-4)

    # 3) recurrent path, f32 weights, time-chunked grid with a ragged tail (T=10, tt=4)
    h_seq, c_fin = lstm_sequence_forward(x_seq, (hx, cx), seq_prep_f32, tt=4)
    jax.block_until_ready((h_seq, c_fin))
    h_r, c_r = hx, cx
    h_list = []
    for t in range(T):
        h_r, c_r = lstm_cell_reference(x_seq[t], (h_r, c_r), params)
        h_list.append(h_r)
    h_seq_r = jnp.stack(h_list, axis=0)
    assert jnp.allclose(h_seq, h_seq_r, atol=1e-4, rtol=1e-4)
    assert jnp.allclose(c_fin, c_r, atol=1e-4, rtol=1e-4)

    # 4) bf16-stored weights, single step, vs a bf16-quantized reference
    q = lambda a: a.astype(jnp.bfloat16).astype(jnp.float32)
    hy_b, cy_b = lstm_cell_forward(x, (hx, cx), step_prep_bf16)
    jax.block_until_ready((hy_b, cy_b))
    params_q = (q(w_ih), q(w_hh), b_ih, b_hh)
    hy_bq, cy_bq = lstm_cell_reference(q(x), (q(hx), cx), params_q)
    assert jnp.allclose(hy_b, hy_bq, atol=2e-2, rtol=2e-2)
    assert jnp.allclose(cy_b, cy_bq, atol=2e-2, rtol=2e-2)

    # 5) bf16-stored weights, recurrent path, vs a per-step bf16-quantized reference
    h_seq_b, c_fin_b = lstm_sequence_forward(x_seq, (hx, cx), seq_prep_bf16, tt=4)
    jax.block_until_ready((h_seq_b, c_fin_b))
    h_r, c_r = hx, cx
    hq_list = []
    for t in range(T):
        h_r, c_r = lstm_cell_reference(q(x_seq[t]), (q(h_r), c_r), params_q)
        hq_list.append(h_r)
    h_seq_bq = jnp.stack(hq_list, axis=0)
    assert jnp.allclose(h_seq_b, h_seq_bq, atol=2e-2, rtol=2e-2)
    assert jnp.allclose(c_fin_b, c_r, atol=2e-2, rtol=2e-2)

    # 6) multi-tile hidden grid (n_tiles > 1) at a larger hidden size, f32 weights
    H2 = 256
    w_ih2 = jax.random.normal(ks[8], (4 * H2, I), jnp.float32) * 0.1
    w_hh2 = jax.random.normal(ks[9], (4 * H2, H2), jnp.float32) * 0.1
    b2 = jnp.zeros((4 * H2,), jnp.float32)
    params2 = (w_ih2, w_hh2, b2, b2)
    prep2 = prepare_lstm_step_params(params2, th=128, param_dtype=jnp.float32)
    assert prep2["n_tiles"] == 2
    hx2 = jax.random.normal(ks[5], (B, H2), jnp.float32)
    cx2 = jax.random.normal(ks[6], (B, H2), jnp.float32)
    hy2, cy2 = lstm_cell_forward(x, (hx2, cx2), prep2)
    jax.block_until_ready((hy2, cy2))
    hy2_r, cy2_r = lstm_cell_reference(x, (hx2, cx2), params2)
    assert jnp.allclose(hy2, hy2_r, atol=1e-4, rtol=1e-4)
    assert jnp.allclose(cy2, cy2_r, atol=1e-4, rtol=1e-4)

    print("KERNEL_OK")
</pallas_src>

<mosaic_0001>
module attributes {stable_mosaic.version = 11 : i64} {
  func.func @_lstm_step_kernel(%arg0: i32, %arg1: memref<8x48xf32, #tpu.memory_space<vmem>>, %arg2: memref<8x128xf32, #tpu.memory_space<vmem>>, %arg3: memref<1x48x512xf32, #tpu.memory_space<vmem>>, %arg4: memref<1x1x512xf32, #tpu.memory_space<vmem>>, %arg5: memref<8x128xf32, #tpu.memory_space<vmem>>, %arg6: memref<8x128xf32, #tpu.memory_space<vmem>>) attributes {dimension_semantics = [#tpu.dimension_semantics<parallel>], iteration_bounds = array<i64: 1>, scalar_prefetch = 0 : i64, scratch_operands = 0 : i64, tpu.core_type = #tpu.core_type<tc>, window_params = [{pipeline_mode = #tpu.pipeline_mode<synchronous>, transform_indices = @transform_0, window_bounds = array<i64: 8, 48>}, {transform_indices = @transform_1, window_bounds = array<i64: 8, 128>}, {transform_indices = @transform_2, window_bounds = array<i64: 1, 48, 512>}, {transform_indices = @transform_3, window_bounds = array<i64: 1, 1, 512>}, {transform_indices = @transform_4, window_bounds = array<i64: 8, 128>}, {transform_indices = @transform_5, window_bounds = array<i64: 8, 128>}]} {
    %c0 = arith.constant 0 : index
    %c0_0 = arith.constant 0 : index
    %c0_1 = arith.constant 0 : index
    %0 = vector.load %arg3[%c0, %c0_0, %c0_1] : memref<1x48x512xf32, #tpu.memory_space<vmem>>, vector<1x48x512xf32>
    %1 = vector.shape_cast %0 : vector<1x48x512xf32> to vector<48x512xf32>
    %c0_2 = arith.constant 0 : index
    %c0_3 = arith.constant 0 : index
    %2 = vector.load %arg1[%c0_2, %c0_3] : memref<8x48xf32, #tpu.memory_space<vmem>>, vector<8x48xf32>
    %cst = arith.constant dense<0.000000e+00> : vector<8x512xf32>
    %3 = tpu.matmul %2, %1, %cst {dimension_numbers = #tpu.dot_dimension_numbers<[1], [0], [0], [1], [0, 0, 1, 1], [], []>} : vector<8x48xf32>, vector<48x512xf32>, vector<8x512xf32> -> vector<8x512xf32>
    %c0_4 = arith.constant 0 : index
    %c0_5 = arith.constant 0 : index
    %c0_6 = arith.constant 0 : index
    %4 = vector.load %arg4[%c0_4, %c0_5, %c0_6] : memref<1x1x512xf32, #tpu.memory_space<vmem>>, vector<1x1x512xf32>
    %5 = vector.shape_cast %4 : vector<1x1x512xf32> to vector<1x512xf32>
    %6 = vector.broadcast %5 : vector<1x512xf32> to vector<8x512xf32>
    %7 = arith.addf %3, %6 : vector<8x512xf32>
    %8 = vector.extract_strided_slice %7 {offsets = [0, 0], sizes = [8, 128], strides = [1, 1]} : vector<8x512xf32> to vector<8x128xf32>
    %9 = arith.negf %8 : vector<8x128xf32>
    %10 = math.exp %9 : vector<8x128xf32>
    %cst_7 = arith.constant 1.000000e+00 : f32
    %11 = vector.broadcast %cst_7 : f32 to vector<8x128xf32>
    %12 = arith.addf %11, %10 : vector<8x128xf32>
    %13 = arith.divf %11, %12 : vector<8x128xf32>
    %14 = vector.extract_strided_slice %7 {offsets = [0, 128], sizes = [8, 128], strides = [1, 1]} : vector<8x512xf32> to vector<8x128xf32>
    %15 = arith.negf %14 : vector<8x128xf32>
    %16 = math.exp %15 : vector<8x128xf32>
    %cst_8 = arith.constant 1.000000e+00 : f32
    %17 = vector.broadcast %cst_8 : f32 to vector<8x128xf32>
    %18 = arith.addf %17, %16 : vector<8x128xf32>
    %19 = arith.divf %17, %18 : vector<8x128xf32>
    %20 = vector.extract_strided_slice %7 {offsets = [0, 256], sizes = [8, 128], strides = [1, 1]} : vector<8x512xf32> to vector<8x128xf32>
    %21 = math.tanh %20 : vector<8x128xf32>
    %22 = vector.extract_strided_slice %7 {offsets = [0, 384], sizes = [8, 128], strides = [1, 1]} : vector<8x512xf32> to vector<8x128xf32>
    %23 = arith.negf %22 : vector<8x128xf32>
    %24 = math.exp %23 : vector<8x128xf32>
    %cst_9 = arith.constant 1.000000e+00 : f32
    %25 = vector.broadcast %cst_9 : f32 to vector<8x128xf32>
    %26 = arith.addf %25, %24 : vector<8x128xf32>
    %27 = arith.divf %25, %26 : vector<8x128xf32>
    %c0_10 = arith.constant 0 : index
    %c0_11 = arith.constant 0 : index
    %28 = vector.load %arg2[%c0_10, %c0_11] : memref<8x128xf32, #tpu.memory_space<vmem>>, vector<8x128xf32>
    %29 = arith.mulf %19, %28 : vector<8x128xf32>
    %30 = arith.mulf %13, %21 : vector<8x128xf32>
    %31 = arith.addf %29, %30 : vector<8x128xf32>
    %32 = math.tanh %31 : vector<8x128xf32>
    %33 = arith.mulf %27, %32 : vector<8x128xf32>
    %c0_12 = arith.constant 0 : index
    %c0_13 = arith.constant 0 : index
    %34 = vector.load %arg6[%c0_12, %c0_13] : memref<8x128xf32, #tpu.memory_space<vmem>>, vector<8x128xf32>
    tpu.vector_store %arg6[%c0_12, %c0_13], %31 {strides = array<i32>} : memref<8x128xf32, #tpu.memory_space<vmem>>, vector<8x128xf32>,
    %c0_14 = arith.constant 0 : index
    %c0_15 = arith.constant 0 : index
    %35 = vector.load %arg5[%c0_14, %c0_15] : memref<8x128xf32, #tpu.memory_space<vmem>>, vector<8x128xf32>
    tpu.vector_store %arg5[%c0_14, %c0_15], %33 {strides = array<i32>} : memref<8x128xf32, #tpu.memory_space<vmem>>, vector<8x128xf32>,
    return
  }
  func.func @transform_0(%arg0: i32) -> (i32, i32) {
    %c0_i32 = arith.constant 0 : i32
    %c0_i32_0 = arith.constant 0 : i32
    %c0_i32_1 = arith.constant 0 : i32
    return %c0_i32, %c0_i32_0 : i32, i32
  }
  func.func @transform_1(%arg0: i32) -> (i32, i32) {
    %c0_i32 = arith.constant 0 : i32
    %c0_i32_0 = arith.constant 0 : i32
    return %c0_i32, %arg0 : i32, i32
  }
  func.func @transform_2(%arg0: i32) -> (i32, i32, i32) {
    %c0_i32 = arith.constant 0 : i32
    %c0_i32_0 = arith.constant 0 : i32
    %c0_i32_1 = arith.constant 0 : i32
    return %arg0, %c0_i32, %c0_i32_0 : i32, i32, i32
  }
  func.func @transform_3(%arg0: i32) -> (i32, i32, i32) {
    %c0_i32 = arith.constant 0 : i32
    %c0_i32_0 = arith.constant 0 : i32
    %c0_i32_1 = arith.constant 0 : i32
    return %arg0, %c0_i32, %c0_i32_0 : i32, i32, i32
  }
  func.func @transform_4(%arg0: i32) -> (i32, i32) {
    %c0_i32 = arith.constant 0 : i32
    %c0_i32_0 = arith.constant 0 : i32
    return %c0_i32, %arg0 : i32, i32
  }
  func.func @transform_5(%arg0: i32) -> (i32, i32) {
    %c0_i32 = arith.constant 0 : i32
    %c0_i32_0 = arith.constant 0 : i32
    return %c0_i32, %arg0 : i32, i32
  }
}

</mosaic_0001>

<llo_original>
// kernel: tpu_custom_call.1
$region0: #{tpu_custom_call.1}
  #allocation0 [shape = 'u32[]', space=smem, size = 0x4, offset = 0x4, fixed_abs, tag = 'smem constant byte address 0x4 - core index']
  #allocation1 [shape = 'u32[144,128]{1,0:T(1,128)}', space=vmem, size = 0x12000, scoped, tag = 'internal scratch']
  %s0 = inlined_call_operand.vmem [shape: f32[8,48], index: 0, kind: input, shape index: {}]
  %s1 = inlined_call_operand.hbm [shape: f32[8,128], index: 1, kind: input, shape index: {}, may-alias: {1,5}]
  %s2 = inlined_call_operand.hbm [shape: f32[1,48,512], index: 2, kind: input, shape index: {}]
  %s3 = inlined_call_operand.vmem [shape: f32[1,1,512], index: 3, kind: input, shape index: {}]
  %s4 = inlined_call_operand.hbm [shape: f32[8,128], index: 4, kind: output, shape index: {0}]
  %s5 = inlined_call_operand.hbm [shape: f32[8,128], index: 5, kind: output, shape index: {1}, may-alias: {1,5}]
  %6 = xla_tuple %s4, %s5
  %s7 = sld [smem:[#allocation0]]
  $region42: #{tpu_custom_call.1} parent=0
    _
  %s9 = ssub.s32 1, %s7
  %s10 = scalar_select 0, %s9, %s7
  $region1: #{tpu_custom_call.1} parent=0
    #allocation2 [shape = 'u8[4096]{0}', space=vmem, size = 0x1000, scoped, tag = 'input window, operand 1, single buffered']
    #allocation3 [shape = 's32[1]{0}', space=sflag, size = 0x4, scoped, tag = 'scoped memory for tpu_custom_call.1']
    #allocation4 [shape = 's32[1]{0}', space=sflag, size = 0x4, scoped, tag = 'scoped memory for tpu_custom_call.1']
    #allocation5 [shape = 'u8[98304]{0}', space=vmem, size = 0x18000, scoped, tag = 'input window, operand 2, single buffered']
    #allocation6 [shape = 's32[1]{0}', space=sflag, size = 0x4, scoped, tag = 'scoped memory for tpu_custom_call.1']
    #allocation7 [shape = 'u8[4096]{0}', space=vmem, size = 0x1000, scoped, tag = 'output window, operand 0, single buffered']
    #allocation8 [shape = 'u8[4096]{0}', space=vmem, size = 0x1000, scoped, tag = 'output window, operand 1, single buffered']
    #allocation9 [shape = 's32[1]{0}', space=sflag, size = 0x4, scoped, tag = 'scoped memory for tpu_custom_call.1']
    %11 = vsyncpa [#allocation3], 0
    %12 = vsyncpa [#allocation6], 0
    %13 = vsyncpa [#allocation4], 0
    %14 = vsyncpa [#allocation9], 0
    // Predicated region
    $region2: #{tpu_custom_call.1} parent=1 // pred_check
      _
    $region3: #{tpu_custom_call.1} parent=1 // pred_check_branch
      %16 = sbr.rel (0) target = $region5
    $region4: #{tpu_custom_call.1} parent=1 // pred_region
      _
    $region5: #{tpu_custom_call.1} parent=1 // pred_fallthru
      _
    // Predicated region
    $region6: #{tpu_custom_call.1} parent=1 // pred_check
      _
    $region7: #{tpu_custom_call.1} parent=1 // pred_check_branch
      %18 = sbr.rel (0) target = $region9
    $region8: #{tpu_custom_call.1} parent=1 // pred_region
      %s20 = ssub.s32 128, 128
      %21 = vsyncadd [#allocation3], %s20
      %s23 = sshll.u32 [#allocation2], 4
      %s24 = int_to_ptr.vmem [resolvable:$true] %s23
      %26 = dma.hbm_to_vmem [thread:$0]  %s1, 128, %s24, [#allocation3]
    $region9: #{tpu_custom_call.1} parent=1 // pred_fallthru
      _
    // Predicated region
    $region10: #{tpu_custom_call.1} parent=1 // pred_check
      _
    $region11: #{tpu_custom_call.1} parent=1 // pred_check_branch
      %28 = sbr.rel (0) target = $region13
    $region12: #{tpu_custom_call.1} parent=1 // pred_region
      %s30 = ssub.s32 3072, 3072
      %31 = vsyncadd [#allocation6], %s30
      %s32 = sshll.u32 [#allocation5], 4
      %s33 = int_to_ptr.vmem [resolvable:$true] %s32
      %38 = dma.hbm_to_vmem [thread:$0]  %s2, 3072, %s33, [#allocation6], 512, 512, 32
    $region13: #{tpu_custom_call.1} parent=1 // pred_fallthru
      _
    // Predicated region
    $region14: #{tpu_custom_call.1} parent=1 // pred_check
      _
    $region15: #{tpu_custom_call.1} parent=1 // pred_check_branch
      %40 = sbr.rel (0) target = $region17
    $region16: #{tpu_custom_call.1} parent=1 // pred_region
      _
    $region17: #{tpu_custom_call.1} parent=1 // pred_fallthru
      _
    // Predicated region
    $region18: #{tpu_custom_call.1} parent=1 // pred_check
      _
    $region19: #{tpu_custom_call.1} parent=1 // pred_check_branch
      %42 = sbr.rel (0) target = $region21
    $region20: #{tpu_custom_call.1} parent=1 // pred_region
      %43 = dma.done [#allocation3], 128
    $region21: #{tpu_custom_call.1} parent=1 // pred_fallthru
      _
    // Predicated region
    $region22: #{tpu_custom_call.1} parent=1 // pred_check
      _
    $region23: #{tpu_custom_call.1} parent=1 // pred_check_branch
      %45 = sbr.rel (0) target = $region25
    $region24: #{tpu_custom_call.1} parent=1 // pred_region
      %46 = dma.done [#allocation6], 3072
    $region25: #{tpu_custom_call.1} parent=1 // pred_fallthru
      _
    %v47 = vld [vmem:[#allocation5] sm:$0xff]
    %v48 = vld [vmem:[#allocation5 + $0x8] sm:$0xff]
    %v49 = vld [vmem:[#allocation5 + $0x10] sm:$0xff]
    %v50 = vld [vmem:[#allocation5 + $0x18] sm:$0xff]
    %v51 = vld [vmem:[#allocation5 + $0x20] sm:$0xff]
    %v52 = vld [vmem:[#allocation5 + $0x28] sm:$0xff]
    %v53 = vld [vmem:[#allocation5 + $0x30] sm:$0xff]
    %v54 = vld [vmem:[#allocation5 + $0x38] sm:$0xff]
    %v55 = vld [vmem:[#allocation5 + $0x40] sm:$0xff]
    %v56 = vld [vmem:[#allocation5 + $0x48] sm:$0xff]
    %v57 = vld [vmem:[#allocation5 + $0x50] sm:$0xff]
    %v58 = vld [vmem:[#allocation5 + $0x58] sm:$0xff]
    %v59 = vld [vmem:[#allocation5 + $0x60] sm:$0xff]
    %v60 = vld [vmem:[#allocation5 + $0x68] sm:$0xff]
    %v61 = vld [vmem:[#allocation5 + $0x70] sm:$0xff]
    %v62 = vld [vmem:[#allocation5 + $0x78] sm:$0xff]
    %v63 = vld [vmem:[#allocation5 + $0x80] sm:$0xff]
    %v64 = vld [vmem:[#allocation5 + $0x88] sm:$0xff]
    %v65 = vld [vmem:[#allocation5 + $0x90] sm:$0xff]
    %v66 = vld [vmem:[#allocation5 + $0x98] sm:$0xff]
    %v67 = vld [vmem:[#allocation5 + $0xa0] sm:$0xff]
    %v68 = vld [vmem:[#allocation5 + $0xa8] sm:$0xff]
    %v69 = vld [vmem:[#allocation5 + $0xb0] sm:$0xff]
    %v70 = vld [vmem:[#allocation5 + $0xb8] sm:$0xff]
    %v71 = vld [vmem:[%s0] sm:$0xff]
    %v72 = vld [vmem:[%s3] sm:$0xf]
    %v74 = vlaneseq
    %v75 = vshrl.u32 %v74, 7
    %v76 = vsub.s32 0, %v75
    %v77 = vrot.slane %v72, %v76
    %v78 = vlaneseq
    %v79 = vshrl.u32 %v78, 7
    %v80 = vsub.s32 1, %v79
    %v81 = vrot.slane %v72, %v80
    %v82 = vlaneseq
    %v83 = vshrl.u32 %v82, 7
    %v84 = vsub.s32 2, %v83
    %v85 = vrot.slane %v72, %v84
    %v86 = vlaneseq
    %v87 = vshrl.u32 %v86, 7
    %v88 = vsub.s32 3, %v87
    %v89 = vrot.slane %v72, %v88
    %vm94 = vcmask 392192
    %v96 = vsel %vm94, %v71, 0
    %98 = vmatprep.subr.mxu0 %v48
    %99 = vmatpush1.msra.mxu0 %v47
    %100 = vmatprep.subr.mxu0 %v52
    %101 = vmatpush1.msra.mxu0 %v51
    %102 = vmatprep.subr.mxu0 %v56
    %103 = vmatpush1.msra.mxu0 %v55
    %104 = vmatprep.subr.mxu0 %v60
    %105 = vmatpush1.msra.mxu0 %v59
    %106 = vmatprep.subr.mxu0 %v64
    %107 = vmatpush1.msra.mxu0 %v63
    %108 = vmatprep.subr.mxu0 %v68
    %109 = vmatpush1.msra.mxu0 %v67
    %110 = vmatprep.subr.mxu0 0.0
    %111 = vmatpush1.msra.mxu0 0.0
    %112 = vmatprep.subr.mxu0 0.0
    %113 = vmatpush1.msra.mxu0 0.0
    %114 = vmatprep.subr.mxu0 0.0
    %115 = vmatpush1.msra.mxu0 0.0
    %116 = vmatprep.subr.mxu0 0.0
    %117 = vmatpush1.msra.mxu0 0.0
    %118 = vmatprep.subr.mxu0 0.0
    %119 = vmatpush1.msra.mxu0 0.0
    %120 = vmatprep.subr.mxu0 0.0
    %121 = vmatpush1.msra.mxu0 0.0
    %122 = vmatprep.subr.mxu0 0.0
    %123 = vmatpush1.msra.mxu0 0.0
    %124 = vmatprep.subr.mxu0 0.0
    %125 = vmatpush1.msra.mxu0 0.0
    %126 = vmatprep.subr.mxu0 0.0
    %127 = vmatpush1.msra.mxu0 0.0
    %128 = vmatprep.subr.mxu0 0.0
    %129 = vmatpush1.msra.mxu0 0.0
    %130 = vmatprep.subr.mxu0 0.0
    %131 = vmatpush1.msra.mxu0 0.0
    %132 = vmatprep.subr.mxu0 0.0
    %133 = vmatpush1.msra.mxu0 0.0
    %134 = vmatprep.subr.mxu0 0.0
    %135 = vmatpush1.msra.mxu0 0.0
    %136 = vmatprep.subr.mxu0 0.0
    %137 = vmatpush1.msra.mxu0 0.0
    %138 = vmatprep.subr.mxu0 0.0
    %139 = vmatpush1.msra.mxu0 0.0
    %140 = vmatprep.subr.mxu0 0.0
    %141 = vmatpush1.msra.mxu0 0.0
    %142 = vmatprep.subr.mxu0 0.0
    %143 = vmatpush1.msra.mxu0 0.0
    %144 = vmatprep.subr.mxu0 0.0
    %145 = vmatpush1.msra.mxu0 0.0
    %146 = vmatprep.subr.mxu0 0.0
    %147 = vmatpush1.msra.mxu0 0.0
    %148 = vmatprep.subr.mxu0 0.0
    %149 = vmatpush1.msra.mxu0 0.0
    %150 = vmatprep.subr.mxu0 0.0
    %151 = vmatpush1.msra.mxu0 0.0
    %152 = vmatprep.subr.mxu0 0.0
    %153 = vmatpush1.msra.mxu0 0.0
    %154 = vmatprep.subr.mxu0 0.0
    %155 = vmatpush1.msra.mxu0 0.0
    %156 = vmatprep.subr.mxu0 0.0
    %157 = vmatpush1.msra.mxu0 0.0
    %158 = vmatprep.subr.mxu0 0.0
    %159 = vmatpush1.msra.mxu0 0.0
    %160 = vmatprep.subr.mxu0 0.0
    %161 = vmatpush1.msra.mxu0 0.0
    %162 = vmatprep.mubr.f32.mxu0 0.0
    %163 = vmatmul.mubr.f32.gmra.mrb[0].mxu0 %v96
    %v164 = vpop.f32.mrb[0].mxu0
    %v165 = vadd.f32 %v77, %v164
    %v166 = vpop.f32.mrb[0].mxu0
    %v167 = vadd.f32 %v81, %v166
    %168 = vdwg.mxu0
    %169 = vmatprep.subr.mxu0 %v50
    %170 = vmatpush1.msra.mxu0 %v49
    %171 = vmatprep.subr.mxu0 %v54
    %172 = vmatpush1.msra.mxu0 %v53
    %173 = vmatprep.subr.mxu0 %v58
    %174 = vmatpush1.msra.mxu0 %v57
    %175 = vmatprep.subr.mxu0 %v62
    %176 = vmatpush1.msra.mxu0 %v61
    %177 = vmatprep.subr.mxu0 %v66
    %178 = vmatpush1.msra.mxu0 %v65
    %179 = vmatprep.subr.mxu0 %v70
    %180 = vmatpush1.msra.mxu0 %v69
    %181 = vmatprep.subr.mxu0 0.0
    %182 = vmatpush1.msra.mxu0 0.0
    %183 = vmatprep.subr.mxu0 0.0
    %184 = vmatpush1.msra.mxu0 0.0
    %185 = vmatprep.subr.mxu0 0.0
    %186 = vmatpush1.msra.mxu0 0.0
    %187 = vmatprep.subr.mxu0 0.0
    %188 = vmatpush1.msra.mxu0 0.0
    %189 = vmatprep.subr.mxu0 0.0
    %190 = vmatpush1.msra.mxu0 0.0
    %191 = vmatprep.subr.mxu0 0.0
    %192 = vmatpush1.msra.mxu0 0.0
    %193 = vmatprep.subr.mxu0 0.0
    %194 = vmatpush1.msra.mxu0 0.0
    %195 = vmatprep.subr.mxu0 0.0
    %196 = vmatpush1.msra.mxu0 0.0
    %197 = vmatprep.subr.mxu0 0.0
    %198 = vmatpush1.msra.mxu0 0.0
    %199 = vmatprep.subr.mxu0 0.0
    %200 = vmatpush1.msra.mxu0 0.0
    %201 = vmatprep.subr.mxu0 0.0
    %202 = vmatpush1.msra.mxu0 0.0
    %203 = vmatprep.subr.mxu0 0.0
    %204 = vmatpush1.msra.mxu0 0.0
    %205 = vmatprep.subr.mxu0 0.0
    %206 = vmatpush1.msra.mxu0 0.0
    %207 = vmatprep.subr.mxu0 0.0
    %208 = vmatpush1.msra.mxu0 0.0
    %209 = vmatprep.subr.mxu0 0.0
    %210 = vmatpush1.msra.mxu0 0.0
    %211 = vmatprep.subr.mxu0 0.0
    %212 = vmatpush1.msra.mxu0 0.0
    %213 = vmatprep.subr.mxu0 0.0
    %214 = vmatpush1.msra.mxu0 0.0
    %215 = vmatprep.subr.mxu0 0.0
    %216 = vmatpush1.msra.mxu0 0.0
    %217 = vmatprep.subr.mxu0 0.0
    %218 = vmatpush1.msra.mxu0 0.0
    %219 = vmatprep.subr.mxu0 0.0
    %220 = vmatpush1.msra.mxu0 0.0
    %221 = vmatprep.subr.mxu0 0.0
    %222 = vmatpush1.msra.mxu0 0.0
    %223 = vmatprep.subr.mxu0 0.0
    %224 = vmatpush1.msra.mxu0 0.0
    %225 = vmatprep.subr.mxu0 0.0
    %226 = vmatpush1.msra.mxu0 0.0
    %227 = vmatprep.subr.mxu0 0.0
    %228 = vmatpush1.msra.mxu0 0.0
    %229 = vmatprep.subr.mxu0 0.0
    %230 = vmatpush1.msra.mxu0 0.0
    %231 = vmatprep.subr.mxu0 0.0
    %232 = vmatpush1.msra.mxu0 0.0
    %233 = vmatprep.mubr.f32.mxu0 0.0
    %234 = vmatmul.mubr.f32.gmra.mrb[0].mxu0 %v96
    %v235 = vpop.f32.mrb[0].mxu0
    %v236 = vadd.f32 %v85, %v235
    %v237 = vpop.f32.mrb[0].mxu0
    %v238 = vadd.f32 %v89, %v237
    %239 = vdwg.mxu0
    %v240 = vxor.u32 %v165, 2147483648
    %v241 = vmul.f32 %v240, 1.442695
    %v242 = vpow.pop %v241
    %v243 = vadd.f32 %v242, 1.0
    %v244 = vrcp.pop %v243
    %v245 = vmul.f32 1.0, %v244
    %v246 = vxor.u32 %v167, 2147483648
    %v247 = vmul.f32 %v246, 1.442695
    %v248 = vpow.pop %v247
    %v249 = vadd.f32 %v248, 1.0
    %v250 = vrcp.pop %v249
    %v251 = vmul.f32 1.0, %v250
    %v252 = vtanh.pop %v236
    %v253 = vxor.u32 %v238, 2147483648
    %v254 = vmul.f32 %v253, 1.442695
    %v255 = vpow.pop %v254
    %v256 = vadd.f32 %v255, 1.0
    %v257 = vrcp.pop %v256
    %v258 = vmul.f32 1.0, %v257
    %v259 = vld [vmem:[#allocation2] sm:$0xff]
    %v260 = vmul.f32 %v251, %v259
    %v261 = vmul.f32 %v245, %v252
    %v262 = vadd.f32 %v260, %v261
    %v263 = vtanh.pop %v262
    %v264 = vmul.f32 %v258, %v263
    %265 = vst [vmem:[#allocation8] sm:$0xff] %v262
    %266 = vst [vmem:[#allocation7] sm:$0xff] %v264
    // Predicated region
    $region26: #{tpu_custom_call.1} parent=1 // pred_check
      _
    $region27: #{tpu_custom_call.1} parent=1 // pred_check_branch
      %268 = sbr.rel (0) target = $region29
    $region28: #{tpu_custom_call.1} parent=1 // pred_region
      %s270 = ssub.s32 128, 128
      %271 = vsyncadd [#allocation4], %s270
      %s273 = sshll.u32 [#allocation7], 4
      %s274 = int_to_ptr.vmem [resolvable:$true] %s273
      %276 = dma.vmem_to_hbm [thread:$0]  %s274, 128, %s4, [#allocation4]
    $region29: #{tpu_custom_call.1} parent=1 // pred_fallthru
      _
    // Predicated region
    $region30: #{tpu_custom_call.1} parent=1 // pred_check
      _
    $region31: #{tpu_custom_call.1} parent=1 // pred_check_branch
      %278 = sbr.rel (0) target = $region33
    $region32: #{tpu_custom_call.1} parent=1 // pred_region
      %s280 = ssub.s32 128, 128
      %281 = vsyncadd [#allocation9], %s280
      %s283 = sshll.u32 [#allocation8], 4
      %s284 = int_to_ptr.vmem [resolvable:$true] %s283
      %286 = dma.vmem_to_hbm [thread:$0]  %s284, 128, %s5, [#allocation9]
    $region33: #{tpu_custom_call.1} parent=1 // pred_fallthru
      _
    // Predicated region
    $region34: #{tpu_custom_call.1} parent=1 // pred_check
      _
    $region35: #{tpu_custom_call.1} parent=1 // pred_check_branch
      %288 = sbr.rel (0) target = $region37
    $region36: #{tpu_custom_call.1} parent=1 // pred_region
      %289 = dma.done [#allocation4], 128
    $region37: #{tpu_custom_call.1} parent=1 // pred_fallthru
      _
    // Predicated region
    $region38: #{tpu_custom_call.1} parent=1 // pred_check
      _
    $region39: #{tpu_custom_call.1} parent=1 // pred_check_branch
      %291 = sbr.rel (0) target = $region41
    $region40: #{tpu_custom_call.1} parent=1 // pred_region
      %292 = dma.done [#allocation9], 128
    $region41: #{tpu_custom_call.1} parent=1 // pred_fallthru
      _
    %293 = vsyncpa [#allocation3], 1
    %294 = vsyncpa [#allocation6], 1
    %295 = vsyncpa [#allocation4], 1
    %296 = vsyncpa [#allocation9], 1

</llo_original>
